<compile_context>
chip_gen: v7x
topology: tpu7x:2x2x1
jax: 0.10.0
libtpu: 0.0.40
codegen_flags: <defaults>
</compile_context>

<pallas_src>
import jax
import jax.numpy as jnp
from jax.experimental import pallas as pl
from jax.experimental.pallas import tpu as pltpu


def _silu_kernel(x_ref, o_ref):
    xf = x_ref[...].astype(jnp.float32)
    # SiLU(x) = x * sigmoid(x); sigmoid(x) = 0.5*(1 + tanh(x/2)) -> one EUP op
    # per element (vs exp + reciprocal = two), the muls/adds ride the VPU slots.
    y = xf * (0.5 + 0.5 * jnp.tanh(0.5 * xf))
    o_ref[...] = y.astype(o_ref.dtype)


def _tpu_generation_params():
    """Return (target_block_bytes, vmem_limit_bytes, min_grid_steps)."""
    vmem_cap = None
    try:
        vmem_cap = getattr(pltpu.get_tpu_info(), "vmem_capacity_bytes", None)
    except Exception:
        vmem_cap = None
    if vmem_cap is None:
        try:
            kind = jax.devices()[0].device_kind.lower()
        except Exception:
            kind = ""
        is_v7 = ("v7" in kind) or ("7x" in kind)
        vmem_cap = (64 if is_v7 else 128) * 1024 * 1024
    if vmem_cap <= 80 * 1024 * 1024:
        # v7x-class: 64 MiB VMEM/TC, 2 TensorCores. 2 arrays x 2 buffers x 4 MiB
        # = 16 MiB, capped at 32 MiB scoped to leave compiler-scratch headroom.
        # Want >= 2 grid steps so both cores get work.
        return 4 * 1024 * 1024, 32 * 1024 * 1024, 2
    # v5e/v6e: 128 MiB VMEM, single TensorCore. 8 MiB blocks (32 MiB
    # double-buffered) with an explicit 64 MiB scoped limit (v5e default is
    # only 16 MiB). No minimum step count — extra steps on 1 TC are pure
    # ~0.35 us/step overhead.
    return 8 * 1024 * 1024, 64 * 1024 * 1024, 1


def _choose_tile_rows(rows, row_bytes, sublane, *, target_bytes, min_steps,
                      min_bytes=512 * 1024):
    """Pick a sublane-aligned row tile close to `target_bytes`, giving at least
    `min_steps` grid steps when the array is large enough, never dropping much
    below ~512 KiB per block."""
    t_target = max(1, target_bytes // row_bytes)
    t_floor = max(1, min_bytes // row_bytes)
    t_steps = pl.cdiv(rows, min_steps)
    t = min(t_target, max(t_floor, t_steps))
    # Keep (8,128)/(16,128)/(32,128) block divisibility for the BlockSpec.
    t = max(sublane, (t // sublane) * sublane)
    if t >= rows:
        return rows  # full-extent second-to-last dim is always a legal block
    return t


def _silu_2d(x2d):
    rows, lanes = x2d.shape
    dtype = x2d.dtype
    itemsize = dtype.itemsize
    # Packed-sublane requirement: 8 for 4-byte, 16 for 2-byte, 32 for 1-byte.
    sublane = max(8, 32 // itemsize)
    target_bytes, vmem_limit_bytes, min_steps = _tpu_generation_params()

    # Lane tiling: full extent when one "minimum" row-group fits the budget
    # (this also legalizes lane counts that are not multiples of 128);
    # otherwise tile lanes in multiples of 128.
    min_rows = min(rows, sublane)
    if lanes < 128 or lanes * min_rows * itemsize <= target_bytes:
        tile_lanes = lanes
    else:
        tile_lanes = max(128, (target_bytes // (min_rows * itemsize)) // 128 * 128)

    tile_rows = _choose_tile_rows(rows, tile_lanes * itemsize, sublane,
                                  target_bytes=target_bytes, min_steps=min_steps)
    grid = (pl.cdiv(rows, tile_rows), pl.cdiv(lanes, tile_lanes))

    return pl.pallas_call(
        _silu_kernel,
        out_shape=jax.ShapeDtypeStruct((rows, lanes), dtype),
        grid_spec=pltpu.PrefetchScalarGridSpec(
            num_scalar_prefetch=0,
            grid=grid,
            in_specs=[pl.BlockSpec((tile_rows, tile_lanes), lambda i, j: (i, j))],
            out_specs=pl.BlockSpec((tile_rows, tile_lanes), lambda i, j: (i, j)),
        ),
        # NOTE(v7x): if profiling shows one idle TensorCore, the row axis can be
        # switched to pltpu.CORE_PARALLEL; "parallel" is kept here for
        # portability across generations.
        compiler_params=pltpu.CompilerParams(
            dimension_semantics=("parallel", "parallel"),
            vmem_limit_bytes=vmem_limit_bytes,
        ),
    )(x2d)


def silu(x):
    """Elementwise SiLU via Pallas. Floating-point inputs only (matches torch)."""
    if not jnp.issubdtype(x.dtype, jnp.floating):
        raise TypeError(f"SiLU expects a floating-point input, got {x.dtype}")
    n = x.size
    if n == 0:
        return x

    # Common case: element count divisible by a lane-dense width -> pure
    # metadata reshape, unmasked full-lane stores, no padding, no extra copies.
    for lanes in (2048, 1024, 512, 256, 128):
        if n % lanes == 0:
            return _silu_2d(x.reshape(n // lanes, lanes)).reshape(x.shape)

    # Ragged element count: collapse to (prod(shape[:-1]), last_dim) and let
    # Pallas mask the partial tail blocks. Masked stores on a narrow last dim
    # are slower per store, but this avoids the ~3x HBM traffic of the old
    # pad + kernel + slice fallback.
    x2d = x.reshape(1, 1) if x.ndim == 0 else x.reshape(-1, x.shape[-1])
    return _silu_2d(x2d).reshape(x.shape)


if __name__ == "__main__":
    key = jax.random.PRNGKey(0)

    def ref(v):
        return v * jax.nn.sigmoid(v)

    # 1) Small NCHW activation map (divisible lane-dense path, single block).
    x = jax.random.normal(key, (2, 4, 16, 16), dtype=jnp.float32)
    y = jax.block_until_ready(silu(x))
    assert y.shape == x.shape and y.dtype == x.dtype
    assert jnp.allclose(y, ref(x), atol=1e-5, rtol=1e-5)

    # 2) Larger map exercising the row-tiling path (divisible lane-dense path).
    x2 = jax.random.normal(jax.random.PRNGKey(1), (4, 8, 80, 80), dtype=jnp.float32)
    y2 = jax.block_until_ready(silu(x2))
    assert jnp.allclose(y2, ref(x2), atol=1e-5, rtol=1e-5)

    # 3) Ragged element count (masked-tail path, no padding round-trip).
    x3 = jax.random.normal(jax.random.PRNGKey(2), (3, 5, 7, 11), dtype=jnp.float32)
    y3 = jax.block_until_ready(silu(x3))
    assert jnp.allclose(y3, ref(x3), atol=1e-5, rtol=1e-5)

    # 4) bf16 input (16-sublane packing path).
    x4 = jax.random.normal(jax.random.PRNGKey(3), (2, 4, 16, 16), dtype=jnp.bfloat16)
    y4 = jax.block_until_ready(silu(x4))
    assert y4.dtype == jnp.bfloat16
    assert jnp.allclose(y4.astype(jnp.float32),
                        ref(x4.astype(jnp.float32)), atol=2e-2, rtol=2e-2)

    print("KERNEL_OK")
</pallas_src>

<mosaic_0001>
module attributes {stable_mosaic.version = 11 : i64} {
  func.func @_silu_kernel(%arg0: i32, %arg1: i32, %arg2: memref<1x2048xf32, #tpu.memory_space<vmem>>, %arg3: memref<1x2048xf32, #tpu.memory_space<vmem>>) attributes {dimension_semantics = [#tpu.dimension_semantics<parallel>, #tpu.dimension_semantics<parallel>], iteration_bounds = array<i64: 1, 1>, scalar_prefetch = 0 : i64, scratch_operands = 0 : i64, tpu.core_type = #tpu.core_type<tc>, window_params = [{transform_indices = @transform_0, window_bounds = array<i64: 1, 2048>}, {transform_indices = @transform_1, window_bounds = array<i64: 1, 2048>}]} {
    %c0 = arith.constant 0 : index
    %c0_0 = arith.constant 0 : index
    %0 = vector.load %arg2[%c0, %c0_0] : memref<1x2048xf32, #tpu.memory_space<vmem>>, vector<1x2048xf32>
    %cst = arith.constant 5.000000e-01 : f32
    %1 = vector.broadcast %cst : f32 to vector<1x2048xf32>
    %2 = arith.mulf %1, %0 : vector<1x2048xf32>
    %3 = math.tanh %2 : vector<1x2048xf32>
    %cst_1 = arith.constant 5.000000e-01 : f32
    %4 = vector.broadcast %cst_1 : f32 to vector<1x2048xf32>
    %5 = arith.mulf %4, %3 : vector<1x2048xf32>
    %cst_2 = arith.constant 5.000000e-01 : f32
    %6 = vector.broadcast %cst_2 : f32 to vector<1x2048xf32>
    %7 = arith.addf %6, %5 : vector<1x2048xf32>
    %8 = arith.mulf %0, %7 : vector<1x2048xf32>
    %c0_3 = arith.constant 0 : index
    %c0_4 = arith.constant 0 : index
    %9 = vector.load %arg3[%c0_3, %c0_4] : memref<1x2048xf32, #tpu.memory_space<vmem>>, vector<1x2048xf32>
    tpu.vector_store %arg3[%c0_3, %c0_4], %8 {strides = array<i32>} : memref<1x2048xf32, #tpu.memory_space<vmem>>, vector<1x2048xf32>,
    return
  }
  func.func @transform_0(%arg0: i32, %arg1: i32) -> (i32, i32) {
    %c0_i32 = arith.constant 0 : i32
    return %arg0, %arg1 : i32, i32
  }
  func.func @transform_1(%arg0: i32, %arg1: i32) -> (i32, i32) {
    %c0_i32 = arith.constant 0 : i32
    return %arg0, %arg1 : i32, i32
  }
}

</mosaic_0001>

<llo_original>
// kernel: tpu_custom_call.1
$region0: #{tpu_custom_call.1}
  #allocation0 [shape = 'u32[]', space=smem, size = 0x4, offset = 0x4, fixed_abs, tag = 'smem constant byte address 0x4 - core index']
  #allocation1 [shape = 'u32[144,128]{1,0:T(1,128)}', space=vmem, size = 0x12000, scoped, tag = 'internal scratch']
  %s0 = inlined_call_operand.hbm [shape: f32[1,2048], index: 0, kind: input, shape index: {}]
  %s1 = inlined_call_operand.hbm [shape: f32[1,2048], index: 1, kind: output, shape index: {}]
  %s2 = sld [smem:[#allocation0]]
  $region18: #{tpu_custom_call.1} parent=0
    _
  %s4 = ssub.s32 1, %s2
  %s5 = scalar_select 0, %s4, %s2
  $region1: #{tpu_custom_call.1} parent=0
    #allocation2 [shape = 'u8[8192]{0}', space=vmem, size = 0x2000, scoped, tag = 'input window, operand 0, single buffered']
    #allocation3 [shape = 's32[1]{0}', space=sflag, size = 0x4, scoped, tag = 'scoped memory for tpu_custom_call.1']
    #allocation4 [shape = 's32[1]{0}', space=sflag, size = 0x4, scoped, tag = 'scoped memory for tpu_custom_call.1']
    #allocation5 [shape = 'u8[8192]{0}', space=vmem, size = 0x2000, scoped, tag = 'output window, operand 0, single buffered']
    %6 = vsyncpa [#allocation3], 0
    %7 = vsyncpa [#allocation4], 0
    // Predicated region
    $region2: #{tpu_custom_call.1} parent=1 // pred_check
      _
    $region3: #{tpu_custom_call.1} parent=1 // pred_check_branch
      %9 = sbr.rel (0) target = $region5
    $region4: #{tpu_custom_call.1} parent=1 // pred_region
      %s11 = ssub.s32 256, 256
      %12 = vsyncadd [#allocation3], %s11
      %s14 = sshll.u32 [#allocation2], 4
      %s15 = int_to_ptr.vmem [resolvable:$true] %s14
      %17 = dma.hbm_to_vmem [thread:$0]  %s0, 256, %s15, [#allocation3]
    $region5: #{tpu_custom_call.1} parent=1 // pred_fallthru
      _
    // Predicated region
    $region6: #{tpu_custom_call.1} parent=1 // pred_check
      _
    $region7: #{tpu_custom_call.1} parent=1 // pred_check_branch
      %19 = sbr.rel (0) target = $region9
    $region8: #{tpu_custom_call.1} parent=1 // pred_region
      %20 = dma.done [#allocation3], 256
    $region9: #{tpu_custom_call.1} parent=1 // pred_fallthru
      _
    %v21 = vld [vmem:[#allocation2] sm:$0xff]
    %v22 = vld [vmem:[#allocation2 + $0x8] sm:$0xff]
    %v23 = vmul.f32 %v21, 0.5
    %v24 = vmul.f32 %v22, 0.5
    %v25 = vtanh.pop %v23
    %v26 = vtanh.pop %v24
    %v27 = vmul.f32 %v25, 0.5
    %v28 = vmul.f32 %v26, 0.5
    %v29 = vadd.f32 %v27, 0.5
    %v30 = vadd.f32 %v28, 0.5
    %v31 = vmul.f32 %v21, %v29
    %v32 = vmul.f32 %v22, %v30
    %33 = vst [vmem:[#allocation5] sm:$0xff] %v31
    %34 = vst [vmem:[#allocation5 + $0x8] sm:$0xff] %v32
    // Predicated region
    $region10: #{tpu_custom_call.1} parent=1 // pred_check
      _
    $region11: #{tpu_custom_call.1} parent=1 // pred_check_branch
      %36 = sbr.rel (0) target = $region13
    $region12: #{tpu_custom_call.1} parent=1 // pred_region
      %s38 = ssub.s32 256, 256
      %39 = vsyncadd [#allocation4], %s38
      %s41 = sshll.u32 [#allocation5], 4
      %s42 = int_to_ptr.vmem [resolvable:$true] %s41
      %44 = dma.vmem_to_hbm [thread:$0]  %s42, 256, %s1, [#allocation4]
    $region13: #{tpu_custom_call.1} parent=1 // pred_fallthru
      _
    // Predicated region
    $region14: #{tpu_custom_call.1} parent=1 // pred_check
      _
    $region15: #{tpu_custom_call.1} parent=1 // pred_check_branch
      %46 = sbr.rel (0) target = $region17
    $region16: #{tpu_custom_call.1} parent=1 // pred_region
      %47 = dma.done [#allocation4], 256
    $region17: #{tpu_custom_call.1} parent=1 // pred_fallthru
      _
    %48 = vsyncpa [#allocation3], 1
    %49 = vsyncpa [#allocation4], 1

</llo_original>
